<compile_context>
chip_gen: v6e
topology: v6e:2x2x1
jax: 0.10.0
libtpu: 0.0.40
codegen_flags: <defaults>
</compile_context>

<pallas_src>
import functools

import jax
import jax.numpy as jnp
from jax import lax
from jax.experimental import pallas as pl
from jax.experimental.pallas import tpu as pltpu


_LANES = 512                      # lane-dense last dim (multiple of 128)
_MAX_TILE_ROWS = 2048             # 2048 x 512 f32 = 4 MiB tiles
_XLA_FALLBACK_ELEMS = 64 * 1024   # below this, fused XLA beats two pallas_call launches


def _round_up(a: int, b: int) -> int:
    return (a + b - 1) // b * b


def _cdiv(a: int, b: int) -> int:
    return (a + b - 1) // b


def _quant_kernel(scale_ref, x_ref, o_ref, tmax_ref, *, valid_rows, tile_rows):
    """Hot path: out = round(x*scale)/scale; emit per-tile max(|round|), masked to valid rows
    so an overhanging last block cannot corrupt the global collapse flag."""
    scale = scale_ref[0, 0]
    x = x_ref[...].astype(jnp.float32)
    scaled = x * scale
    q = jnp.round(scaled)                       # round-half-to-even, same as torch.round
    o_ref[...] = (q / scale).astype(o_ref.dtype)

    # Rows past the real end of the array (overhanging last block) hold unspecified data:
    # mask them to 0 so they cannot suppress the collapse flag.  0 < 1e-6, so masking is safe.
    row_start = pl.program_id(0) * tile_rows
    row_ids = row_start + lax.broadcasted_iota(jnp.int32, q.shape, 0)
    absq = jnp.where(row_ids < valid_rows, jnp.abs(q), 0.0)
    # Finish the reduction in-kernel (sublane reduce then lane reduce -> (1,1); XLU slots).
    m = jnp.max(jnp.max(absq, axis=0, keepdims=True), axis=1, keepdims=True)
    tmax_ref[...] = jnp.broadcast_to(m, (1, 128)).reshape(1, 1, 128)


def _fallback_kernel(scale_ref, x_ref, o_ref):
    """Rare collapse path: out = sign(x*scale) * max(|x*scale|, 0.25) / scale."""
    scale = scale_ref[0, 0]
    x = x_ref[...].astype(jnp.float32)
    scaled = x * scale
    fb = jnp.sign(scaled) * jnp.maximum(jnp.abs(scaled), 0.25)
    o_ref[...] = (fb / scale).astype(o_ref.dtype)


def _quantizer_xla(x, scale_factor):
    """Fused pure-XLA path for tiny tensors (same semantics)."""
    scale = jnp.float32(scale_factor)
    scaled = x.astype(jnp.float32) * scale
    q = jnp.round(scaled)
    all_zero = jnp.all(jnp.abs(q) < 1e-6)
    fb = jnp.sign(scaled) * jnp.maximum(jnp.abs(scaled), 0.25)
    return (jnp.where(all_zero, fb, q) / scale).astype(x.dtype)


def quantizer_vnvc(x: jax.Array, scale_factor: float = 20.0) -> jax.Array:
    """Forward pass of QuantizerVNVC (inference / straight-through value path)."""
    # TODO(synk): training-path uniform(-0.5, 0.5) noise (added only when grads are required
    # in PyTorch) is omitted; the inference/forward value path is exact.
    orig_shape = x.shape
    orig_dtype = x.dtype
    n = int(x.size)

    if n == 0:
        return x
    if n < _XLA_FALLBACK_ELEMS:
        return _quantizer_xla(x, scale_factor)

    lanes = _LANES
    xf = x.reshape(-1)
    rem = n % lanes
    if rem != 0:
        # Rare path: pad only up to the next lane multiple (zero rounds to 0, so it cannot
        # flip the collapse decision; padded outputs are sliced off below).
        xf = jnp.pad(xf, (0, lanes - rem))
    rows = int(xf.size) // lanes
    x2d = xf.reshape(rows, lanes)

    # >= 2 grid steps (v7x megacore), sublane-aligned tile height, capped at 4 MiB f32 tiles.
    # The last block may overhang `rows`; that is handled inside the kernel.
    tile_rows = min(_MAX_TILE_ROWS, _round_up(_cdiv(rows, 2), 8))
    n_tiles = _cdiv(rows, tile_rows)

    scale_arr = jnp.full((1, 1), scale_factor, dtype=jnp.float32)

    itemsize = jnp.dtype(orig_dtype).itemsize
    # Double-buffered in+out tiles plus headroom for in-kernel f32 intermediates.
    vmem_limit = int(min(4 * tile_rows * lanes * itemsize + 32 * 2**20, 64 * 2**20))
    cparams = pltpu.CompilerParams(
        dimension_semantics=("parallel",),
        vmem_limit_bytes=vmem_limit,
    )

    smem_spec = pl.BlockSpec(memory_space=pltpu.MemorySpace.SMEM)
    tile_spec = pl.BlockSpec((tile_rows, lanes), lambda i: (i, 0))

    kernel = functools.partial(_quant_kernel, valid_rows=rows, tile_rows=tile_rows)

    out2d, tile_max = pl.pallas_call(
        kernel,
        grid=(n_tiles,),
        in_specs=[smem_spec, tile_spec],
        out_specs=[
            tile_spec,
            pl.BlockSpec((1, 1, 128), lambda i: (i, 0, 0)),
        ],
        out_shape=[
            jax.ShapeDtypeStruct((rows, lanes), orig_dtype),
            jax.ShapeDtypeStruct((n_tiles, 1, 128), jnp.float32),
        ],
        compiler_params=cparams,
    )(scale_arr, x2d)

    # Global collapse decision: all(|round(x*scale)| < 1e-6)  <=>  max over tiles < 1e-6.
    all_zero = jnp.max(tile_max) < 1e-6

    def _rescue():
        return pl.pallas_call(
            _fallback_kernel,
            grid=(n_tiles,),
            in_specs=[smem_spec, tile_spec],
            out_specs=tile_spec,
            out_shape=jax.ShapeDtypeStruct((rows, lanes), orig_dtype),
            compiler_params=cparams,
        )(scale_arr, x2d)

    out2d = lax.cond(all_zero, _rescue, lambda: out2d)

    out_flat = out2d.reshape(-1)
    if rem != 0:
        out_flat = out_flat[:n]
    return out_flat.reshape(orig_shape)


if __name__ == "__main__":
    scale = 20.0

    def ref_fn(x):
        s = x.astype(jnp.float32) * scale
        q = jnp.round(s)
        all_zero = jnp.all(jnp.abs(q) < 1e-6)
        fb = jnp.sign(s) * jnp.maximum(jnp.abs(s), 0.25)
        return (jnp.where(all_zero, fb, q) / scale).astype(x.dtype)

    # 1) Tiny conv-latent-style input: exercises the fused-XLA small-tensor path.
    x1 = jax.random.normal(jax.random.PRNGKey(0), (2, 4, 16, 16), dtype=jnp.float32) * 0.1
    o1 = jax.block_until_ready(quantizer_vnvc(x1, scale))
    assert o1.shape == x1.shape and o1.dtype == x1.dtype
    assert jnp.allclose(o1, ref_fn(x1), atol=1e-6), "XLA-path mismatch"

    # 2) Pallas path, size divisible by 512 (no pad, no overhang, 2 grid tiles).
    x2 = jax.random.normal(jax.random.PRNGKey(1), (2, 64, 32, 32), dtype=jnp.float32) * 0.1
    o2 = jax.block_until_ready(quantizer_vnvc(x2, scale))
    assert o2.shape == x2.shape and o2.dtype == x2.dtype
    assert jnp.allclose(o2, ref_fn(x2), atol=1e-6), "Pallas-path mismatch"

    # 3) Pallas path with an overhanging last tile + collapse branch:
    #    verifies OOB garbage is masked out of the collapse flag and the rescue kernel runs.
    x3 = jnp.full((2, 65, 32, 32), 1e-4, dtype=jnp.float32)
    o3 = jax.block_until_ready(quantizer_vnvc(x3, scale))
    assert jnp.allclose(o3, jnp.full_like(x3, 0.25 / scale), atol=1e-6), "collapse-branch mismatch"

    # 4) Pallas path with an overhanging last tile, normal branch.
    x4 = jax.random.normal(jax.random.PRNGKey(2), (2, 65, 32, 32), dtype=jnp.float32) * 0.1
    o4 = jax.block_until_ready(quantizer_vnvc(x4, scale))
    assert jnp.allclose(o4, ref_fn(x4), atol=1e-6), "overhang-path mismatch"

    print("KERNEL_OK")
</pallas_src>

<mosaic_0001>
module attributes {stable_mosaic.version = 11 : i64} {
  func.func @_quant_kernel(%arg0: i32, %arg1: memref<1x1xf32, #tpu.memory_space<smem>>, %arg2: memref<128x512xf32, #tpu.memory_space<vmem>>, %arg3: memref<128x512xf32, #tpu.memory_space<vmem>>, %arg4: memref<1x1x128xf32, #tpu.memory_space<vmem>>) attributes {dimension_semantics = [#tpu.dimension_semantics<parallel>], iteration_bounds = array<i64: 2>, scalar_prefetch = 0 : i64, scratch_operands = 0 : i64, tpu.core_type = #tpu.core_type<tc>, window_params = [{transform_indices = @transform_0, window_bounds = array<i64: 1, 1>}, {transform_indices = @transform_1, window_bounds = array<i64: 128, 512>}, {transform_indices = @transform_2, window_bounds = array<i64: 128, 512>}, {transform_indices = @transform_3, window_bounds = array<i64: 1, 1, 128>}]} {
    %c0 = arith.constant 0 : index
    %c0_0 = arith.constant 0 : index
    %0 = memref.load %arg1[%c0, %c0_0] : memref<1x1xf32, #tpu.memory_space<smem>>
    %c0_1 = arith.constant 0 : index
    %c0_2 = arith.constant 0 : index
    %1 = vector.load %arg2[%c0_1, %c0_2] : memref<128x512xf32, #tpu.memory_space<vmem>>, vector<128x512xf32>
    %2 = vector.broadcast %0 : f32 to vector<128x512xf32>
    %3 = arith.mulf %1, %2 : vector<128x512xf32>
    %4 = math.roundeven %3 : vector<128x512xf32>
    %5 = vector.broadcast %0 : f32 to vector<128x512xf32>
    %6 = arith.divf %4, %5 : vector<128x512xf32>
    %c0_3 = arith.constant 0 : index
    %c0_4 = arith.constant 0 : index
    %7 = vector.load %arg3[%c0_3, %c0_4] : memref<128x512xf32, #tpu.memory_space<vmem>>, vector<128x512xf32>
    tpu.vector_store %arg3[%c0_3, %c0_4], %6 {strides = array<i32>} : memref<128x512xf32, #tpu.memory_space<vmem>>, vector<128x512xf32>,
    %c128_i32 = arith.constant 128 : i32
    %8 = arith.muli %arg0, %c128_i32 : i32
    %9 = tpu.iota {dimensions = array<i32: 0>} : vector<128x512xi32>
    %10 = vector.broadcast %8 : i32 to vector<128x512xi32>
    %11 = arith.addi %10, %9 : vector<128x512xi32>
    %c256_i32 = arith.constant 256 : i32
    %12 = vector.broadcast %c256_i32 : i32 to vector<128x512xi32>
    %13 = arith.cmpi slt, %11, %12 : vector<128x512xi32>
    %14 = math.absf %4 : vector<128x512xf32>
    %cst = arith.constant 0.000000e+00 : f32
    %15 = vector.broadcast %cst : f32 to vector<128x512xf32>
    %16 = arith.select %13, %14, %15 : vector<128x512xi1>, vector<128x512xf32>
    %cst_5 = arith.constant dense<0xFF800000> : vector<512xf32>
    %17 = vector.multi_reduction <maximumf>, %16, %cst_5 [0] : vector<128x512xf32> to vector<512xf32>
    %18 = vector.shape_cast %17 : vector<512xf32> to vector<1x512xf32>
    %cst_6 = arith.constant dense<0xFF800000> : vector<1xf32>
    %19 = vector.multi_reduction <maximumf>, %18, %cst_6 [1] : vector<1x512xf32> to vector<1xf32>
    %20 = vector.shape_cast %19 : vector<1xf32> to vector<1x1xf32>
    %21 = vector.shape_cast %20 : vector<1x1xf32> to vector<1x1xf32>
    %22 = vector.broadcast %21 : vector<1x1xf32> to vector<1x128xf32>
    %23 = vector.shape_cast %22 : vector<1x128xf32> to vector<1x1x128xf32>
    %c0_7 = arith.constant 0 : index
    %c0_8 = arith.constant 0 : index
    %c0_9 = arith.constant 0 : index
    %24 = vector.load %arg4[%c0_7, %c0_8, %c0_9] : memref<1x1x128xf32, #tpu.memory_space<vmem>>, vector<1x1x128xf32>
    tpu.vector_store %arg4[%c0_7, %c0_8, %c0_9], %23 {strides = array<i32>} : memref<1x1x128xf32, #tpu.memory_space<vmem>>, vector<1x1x128xf32>,
    return
  }
  func.func @transform_0(%arg0: i32) -> (i32, i32) {
    %c0_i32 = arith.constant 0 : i32
    %c0_i32_0 = arith.constant 0 : i32
    %c0_i32_1 = arith.constant 0 : i32
    return %c0_i32, %c0_i32_0 : i32, i32
  }
  func.func @transform_1(%arg0: i32) -> (i32, i32) {
    %c0_i32 = arith.constant 0 : i32
    %c0_i32_0 = arith.constant 0 : i32
    return %arg0, %c0_i32 : i32, i32
  }
  func.func @transform_2(%arg0: i32) -> (i32, i32) {
    %c0_i32 = arith.constant 0 : i32
    %c0_i32_0 = arith.constant 0 : i32
    return %arg0, %c0_i32 : i32, i32
  }
  func.func @transform_3(%arg0: i32) -> (i32, i32, i32) {
    %c0_i32 = arith.constant 0 : i32
    %c0_i32_0 = arith.constant 0 : i32
    %c0_i32_1 = arith.constant 0 : i32
    return %arg0, %c0_i32, %c0_i32_0 : i32, i32, i32
  }
}

</mosaic_0001>

<llo_original>
// kernel: tpu_custom_call.1
$region0: #{tpu_custom_call.1}
  #allocation0 [shape = 'u32[]', space=smem, size = 0x4, offset = 0x4, fixed_abs, tag = 'smem constant byte address 0x4 - core index']
  #allocation1 [shape = 'u32[144,128]{1,0:T(1,128)}', space=vmem, size = 0x12000, scoped, tag = 'internal scratch']
  #allocation2 [shape = 'f32[1,1]{1,0:T(1,128)S(6)}', space=smem, size = 0x200, scoped, tag = 'scoped memory for tpu_custom_call.1']
  %s0 = inlined_call_operand.<no memory space> [shape: f32[1,1], index: 0, kind: input, shape index: {}]
  %s1 = inlined_call_operand.hbm [shape: f32[256,512], index: 1, kind: input, shape index: {}]
  %s2 = inlined_call_operand.hbm [shape: f32[256,512], index: 2, kind: output, shape index: {0}]
  %s3 = inlined_call_operand.hbm [shape: f32[2,1,128], index: 3, kind: output, shape index: {1}]
  %4 = xla_tuple %s2, %s3
  %s5 = sld [smem:[#allocation0]]
  $region53: #{tpu_custom_call.1} parent=0
    _
  %s7 = ssub.s32 1, %s5
  %s8 = scalar_select 0, %s7, %s5
  %9 = sst [smem:[#allocation2]] %s0
  $region1: #{tpu_custom_call.1} parent=0
    #allocation3 [shape = 'u8[524288]{0}', space=vmem, size = 0x80000, scoped, tag = 'input window, operand 1']
    #allocation4 [shape = 's32[2]{0}', space=sflag, size = 0x8, scoped, tag = 'scoped memory for tpu_custom_call.1']
    #allocation5 [shape = 's32[2]{0}', space=sflag, size = 0x8, scoped, tag = 'scoped memory for tpu_custom_call.1']
    #allocation6 [shape = 'u8[524288]{0}', space=vmem, size = 0x80000, scoped, tag = 'output window, operand 0']
    #allocation7 [shape = 'u8[1024]{0}', space=vmem, size = 0x400, scoped, tag = 'output window, operand 1']
    #allocation8 [shape = 's32[2]{0}', space=sflag, size = 0x8, scoped, tag = 'scoped memory for tpu_custom_call.1']
    %10 = vsyncpa [#allocation4], 0
    %s11 = scalar_lea.sflag [#allocation4], 1
    %12 = vsyncpa %s11, 0
    %13 = vsyncpa [#allocation5], 0
    %s14 = scalar_lea.sflag [#allocation5], 1
    %15 = vsyncpa %s14, 0
    %16 = vsyncpa [#allocation8], 0
    %s17 = scalar_lea.sflag [#allocation8], 1
    %18 = vsyncpa %s17, 0
    loop: start=0, step=1, limit=4
    $region2: #{tpu_custom_call.1} parent=1 // loop_pre_header
      _
    $region3: #{tpu_custom_call.1} parent=1 // loop_header
      %s20 = sphi 0, %s24
      %p21 = scmp.ge.s32.totalorder %s20, 4
      %s28 = sphi 0, %s28
      %s30 = sphi 0, %s28
      %s31 = sphi 0, %s30
      %s45 = sphi 0, %s31
      %s51 = sphi 0, %s53
      %s54 = sphi 0, %s51
      %s55 = sphi 0, %s54
      %s71 = sphi 0, %s55
      %s77 = sphi 0, %s79
      %s80 = sphi 0, %s77
      %s81 = sphi 0, %s80
      %s97 = sphi 0, %s81
      %s103 = sphi 0, %s105
      %s106 = sphi 0, %s103
      %s107 = sphi 0, %s106
      %s123 = sphi 0, %s107
    $region4: #{tpu_custom_call.1} parent=1 // loop_header_branch
      %23 = sbr.rel (%p21) target = $region8
    $region5: #{tpu_custom_call.1} parent=1 // loop_body
      %s25 = ssub.s32 %s20, 1
      %s26 = ssub.s32 %s20, 2
      %s27 = sadd.s32 %s20, 1
      %s29 = sadd.s32 %s28, 1
      %p32 = scmp.eq.s32.totalorder %s20, 1
      %p33 = scmp.ne.s32.totalorder %s28, %s30
      %p34 = scmp.eq.s32.totalorder %s20, 0
      %p35 = por %p33, %p34
      %p36 = scmp.ne.s32.totalorder %s28, %s30
      %p37 = scmp.eq.s32.totalorder %s25, 1
      %p38 = por %p36, %p37
      %p39 = scmp.ne.s32.totalorder %s30, %s31
      %p40 = scmp.eq.s32.totalorder %s25, 0
      %p41 = por %p39, %p40
      %p42 = scmp.ne.s32.totalorder %s30, %s31
      %p43 = scmp.eq.s32.totalorder %s26, 1
      %p44 = por %p42, %p43
      %p46 = scmp.ne.s32.totalorder %s31, %s45
      %p47 = scmp.eq.s32.totalorder %s26, 0
      %p48 = por %p46, %p47
      %s49 = ssub.s32 %s20, %s27
      %p50 = scmp.eq.s32.totalorder %s49, 0
      %s52 = sadd.s32 %s51, 1
      %s53 = scalar_select %p50, %s51, %s52
      %p56 = pneg %p50
      %p57 = scmp.eq.s32.totalorder %s20, 1
      %p58 = por %p56, %p57
      %p59 = scmp.ne.s32.totalorder %s51, %s54
      %p60 = scmp.eq.s32.totalorder %s20, 0
      %p61 = por %p59, %p60
      %p62 = scmp.ne.s32.totalorder %s51, %s54
      %p63 = scmp.eq.s32.totalorder %s25, 1
      %p64 = por %p62, %p63
      %p65 = scmp.ne.s32.totalorder %s54, %s55
      %p66 = scmp.eq.s32.totalorder %s25, 0
      %p67 = por %p65, %p66
      %p68 = scmp.ne.s32.totalorder %s54, %s55
      %p69 = scmp.eq.s32.totalorder %s26, 1
      %p70 = por %p68, %p69
      %p72 = scmp.ne.s32.totalorder %s55, %s71
      %p73 = scmp.eq.s32.totalorder %s26, 0
      %p74 = por %p72, %p73
      %s75 = ssub.s32 %s20, %s27
      %p76 = scmp.eq.s32.totalorder %s75, 0
      %s78 = sadd.s32 %s77, 1
      %s79 = scalar_select %p76, %s77, %s78
      %p82 = pneg %p76
      %p83 = scmp.eq.s32.totalorder %s20, 1
      %p84 = por %p82, %p83
      %p85 = scmp.ne.s32.totalorder %s77, %s80
      %p86 = scmp.eq.s32.totalorder %s20, 0
      %p87 = por %p85, %p86
      %p88 = scmp.ne.s32.totalorder %s77, %s80
      %p89 = scmp.eq.s32.totalorder %s25, 1
      %p90 = por %p88, %p89
      %p91 = scmp.ne.s32.totalorder %s80, %s81
      %p92 = scmp.eq.s32.totalorder %s25, 0
      %p93 = por %p91, %p92
      %p94 = scmp.ne.s32.totalorder %s80, %s81
      %p95 = scmp.eq.s32.totalorder %s26, 1
      %p96 = por %p94, %p95
      %p98 = scmp.ne.s32.totalorder %s81, %s97
      %p99 = scmp.eq.s32.totalorder %s26, 0
      %p100 = por %p98, %p99
      %s101 = ssub.s32 %s20, %s27
      %p102 = scmp.eq.s32.totalorder %s101, 0
      %s104 = sadd.s32 %s103, 1
      %s105 = scalar_select %p102, %s103, %s104
      %p108 = pneg %p102
      %p109 = scmp.eq.s32.totalorder %s20, 1
      %p110 = por %p108, %p109
      %p111 = scmp.ne.s32.totalorder %s103, %s106
      %p112 = scmp.eq.s32.totalorder %s20, 0
      %p113 = por %p111, %p112
      %p114 = scmp.ne.s32.totalorder %s103, %s106
      %p115 = scmp.eq.s32.totalorder %s25, 1
      %p116 = por %p114, %p115
      %p117 = scmp.ne.s32.totalorder %s106, %s107
      %p118 = scmp.eq.s32.totalorder %s25, 0
      %p119 = por %p117, %p118
      %p120 = scmp.ne.s32.totalorder %s106, %s107
      %p121 = scmp.eq.s32.totalorder %s26, 1
      %p122 = por %p120, %p121
      %p124 = scmp.ne.s32.totalorder %s107, %s123
      %p125 = scmp.eq.s32.totalorder %s26, 0
      %p126 = por %p124, %p125
      %p127 = scmp.le.s32.totalorder 1, %s20
      %p128 = scmp.lt.s32.totalorder %s20, 3
      %p129 = pnand %p127, %p128
      %p130 = pneg %p129
      // Predicated region
      $region9: #{tpu_custom_call.1} parent=5 // pred_check
        _
      $region10: #{tpu_custom_call.1} parent=5 // pred_check_branch
        %132 = sbr.rel (%p129) target = $region12
      $region11: #{tpu_custom_call.1} parent=5 // pred_region
        %s133 = ssub.s32 %s20, 1
        // Predicated region
        $region13: #{tpu_custom_call.1} parent=11 // pred_check
          %p134 = pneg %p41
        $region14: #{tpu_custom_call.1} parent=11 // pred_check_branch
          %136 = sbr.rel (%p134) target = $region16
        $region15: #{tpu_custom_call.1} parent=11 // pred_region
          _
        $region16: #{tpu_custom_call.1} parent=11 // pred_fallthru
          _
      $region12: #{tpu_custom_call.1} parent=5 // pred_fallthru
        _
      %p137 = scmp.lt.s32.totalorder %s20, 2
      // Predicated region
      $region17: #{tpu_custom_call.1} parent=5 // pred_check
        %p138 = pneg %p137
      $region18: #{tpu_custom_call.1} parent=5 // pred_check_branch
        %140 = sbr.rel (%p138) target = $region20
      $region19: #{tpu_custom_call.1} parent=5 // pred_region
        // Predicated region
        $region21: #{tpu_custom_call.1} parent=19 // pred_check
          %p141 = pneg %p61
        $region22: #{tpu_custom_call.1} parent=19 // pred_check_branch
          %143 = sbr.rel (%p141) target = $region24
        $region23: #{tpu_custom_call.1} parent=19 // pred_region
          %s144 = sand.u32 %s51, 1
          %s145 = scalar_lea.sflag [#allocation4], %s144
          %s146 = sand.u32 %s51, 1
          %s147 = smul.addr %s146, 512
          %s148 = scalar_lea.vmem [#allocation3], %s147
          %s149 = smul.u32 16, %s20
          %s151 = ssub.s32 8192, 8192
          %152 = vsyncadd %s145, %s151
          %s153 = smul.addr %s149, 4
          %s154 = smul.addr %s153, 128
          %s155 = scalar_lea.hbm %s1, %s154
          %s156 = sshll.u32 %s148, 4
          %s157 = int_to_ptr.vmem [resolvable:$true] %s156
          %162 = dma.hbm_to_vmem [thread:$0]  %s155, 8192, %s157, %s145, 512, 512, 32
        $region24: #{tpu_custom_call.1} parent=19 // pred_fallthru
          _
      $region20: #{tpu_custom_call.1} parent=5 // pred_fallthru
        _
      %p163 = scmp.le.s32.totalorder 1, %s20
      %p164 = scmp.lt.s32.totalorder %s20, 3
      %p165 = pnand %p163, %p164
      %p166 = pneg %p165
      // Predicated region
      $region25: #{tpu_custom_call.1} parent=5 // pred_check
        _
      $region26: #{tpu_custom_call.1} parent=5 // pred_check_branch
        %168 = sbr.rel (%p165) target = $region28
      $region27: #{tpu_custom_call.1} parent=5 // pred_region
        %s169 = ssub.s32 %s20, 1
        %s170 = sand.u32 %s54, 1
        %s171 = scalar_lea.sflag [#allocation4], %s170
        %s172 = sand.u32 %s54, 1
        %s173 = smul.addr %s172, 512
        %s174 = scalar_lea.vmem [#allocation3], %s173
        // Predicated region
        $region29: #{tpu_custom_call.1} parent=27 // pred_check
          %p175 = pneg %p67
        $region30: #{tpu_custom_call.1} parent=27 // pred_check_branch
          %177 = sbr.rel (%p175) target = $region32
        $region31: #{tpu_custom_call.1} parent=27 // pred_region
          %178 = dma.done %s171, 8192
        $region32: #{tpu_custom_call.1} parent=27 // pred_fallthru
          _
        %p179 = pneg %p41
        %p180 = pneg %p38
        %s181 = sand.u32 %s54, 1
        %s182 = scalar_lea.sflag [#allocation4], %s181
        %s183 = sand.u32 %s54, 1
        %s184 = smul.addr %s183, 512
        %s185 = scalar_lea.vmem [#allocation3], %s184
        %p186 = pneg %p67
        %p187 = pneg %p64
        %p188 = pneg %p93
        %p189 = pneg %p90
        %s190 = sand.u32 %s80, 1
        %s191 = scalar_lea.sflag [#allocation5], %s190
        %s192 = sand.u32 %s80, 1
        %s193 = smul.addr %s192, 512
        %s194 = scalar_lea.vmem [#allocation6], %s193
        %p195 = pneg %p119
        %p196 = pneg %p116
        %s197 = sand.u32 %s106, 1
        %s198 = scalar_lea.sflag [#allocation8], %s197
        %s199 = sand.u32 %s106, 1
        %s200 = scalar_lea.vmem [#allocation7], %s199
        %s201 = smul.u32 16, %s25
        %s202 = smul.u32 16, %s25
        %s203 = sld [smem:[#allocation2]]
        %v204 = vld [vmem:[%s174] sm:$0xff]
        %v205 = vld [vmem:[%s174 + $0x8] sm:$0xff]
        %v206 = vld [vmem:[%s174 + $0x10] sm:$0xff]
        %v207 = vld [vmem:[%s174 + $0x18] sm:$0xff]
        %v208 = vld [vmem:[%s174 + $0x20] sm:$0xff]
        %v209 = vld [vmem:[%s174 + $0x28] sm:$0xff]
        %v210 = vld [vmem:[%s174 + $0x30] sm:$0xff]
        %v211 = vld [vmem:[%s174 + $0x38] sm:$0xff]
        %v212 = vld [vmem:[%s174 + $0x40] sm:$0xff]
        %v213 = vld [vmem:[%s174 + $0x48] sm:$0xff]
        %v214 = vld [vmem:[%s174 + $0x50] sm:$0xff]
        %v215 = vld [vmem:[%s174 + $0x58] sm:$0xff]
        %v216 = vld [vmem:[%s174 + $0x60] sm:$0xff]
        %v217 = vld [vmem:[%s174 + $0x68] sm:$0xff]
        %v218 = vld [vmem:[%s174 + $0x70] sm:$0xff]
        %v219 = vld [vmem:[%s174 + $0x78] sm:$0xff]
        %v220 = vld [vmem:[%s174 + $0x80] sm:$0xff]
        %v221 = vld [vmem:[%s174 + $0x88] sm:$0xff]
        %v222 = vld [vmem:[%s174 + $0x90] sm:$0xff]
        %v223 = vld [vmem:[%s174 + $0x98] sm:$0xff]
        %v224 = vld [vmem:[%s174 + $0xa0] sm:$0xff]
        %v225 = vld [vmem:[%s174 + $0xa8] sm:$0xff]
        %v226 = vld [vmem:[%s174 + $0xb0] sm:$0xff]
        %v227 = vld [vmem:[%s174 + $0xb8] sm:$0xff]
        %v228 = vld [vmem:[%s174 + $0xc0] sm:$0xff]
        %v229 = vld [vmem:[%s174 + $0xc8] sm:$0xff]
        %v230 = vld [vmem:[%s174 + $0xd0] sm:$0xff]
        %v231 = vld [vmem:[%s174 + $0xd8] sm:$0xff]
        %v232 = vld [vmem:[%s174 + $0xe0] sm:$0xff]
        %v233 = vld [vmem:[%s174 + $0xe8] sm:$0xff]
        %v234 = vld [vmem:[%s174 + $0xf0] sm:$0xff]
        %v235 = vld [vmem:[%s174 + $0xf8] sm:$0xff]
        %v236 = vld [vmem:[%s174 + $0x100] sm:$0xff]
        %v237 = vld [vmem:[%s174 + $0x108] sm:$0xff]
        %v238 = vld [vmem:[%s174 + $0x110] sm:$0xff]
        %v239 = vld [vmem:[%s174 + $0x118] sm:$0xff]
        %v240 = vld [vmem:[%s174 + $0x120] sm:$0xff]
        %v241 = vld [vmem:[%s174 + $0x128] sm:$0xff]
        %v242 = vld [vmem:[%s174 + $0x130] sm:$0xff]
        %v243 = vld [vmem:[%s174 + $0x138] sm:$0xff]
        %v244 = vld [vmem:[%s174 + $0x140] sm:$0xff]
        %v245 = vld [vmem:[%s174 + $0x148] sm:$0xff]
        %v246 = vld [vmem:[%s174 + $0x150] sm:$0xff]
        %v247 = vld [vmem:[%s174 + $0x158] sm:$0xff]
        %v248 = vld [vmem:[%s174 + $0x160] sm:$0xff]
        %v249 = vld [vmem:[%s174 + $0x168] sm:$0xff]
        %v250 = vld [vmem:[%s174 + $0x170] sm:$0xff]
        %v251 = vld [vmem:[%s174 + $0x178] sm:$0xff]
        %v252 = vld [vmem:[%s174 + $0x180] sm:$0xff]
        %v253 = vld [vmem:[%s174 + $0x188] sm:$0xff]
        %v254 = vld [vmem:[%s174 + $0x190] sm:$0xff]
        %v255 = vld [vmem:[%s174 + $0x198] sm:$0xff]
        %v256 = vld [vmem:[%s174 + $0x1a0] sm:$0xff]
        %v257 = vld [vmem:[%s174 + $0x1a8] sm:$0xff]
        %v258 = vld [vmem:[%s174 + $0x1b0] sm:$0xff]
        %v259 = vld [vmem:[%s174 + $0x1b8] sm:$0xff]
        %v260 = vld [vmem:[%s174 + $0x1c0] sm:$0xff]
        %v261 = vld [vmem:[%s174 + $0x1c8] sm:$0xff]
        %v262 = vld [vmem:[%s174 + $0x1d0] sm:$0xff]
        %v263 = vld [vmem:[%s174 + $0x1d8] sm:$0xff]
        %v264 = vld [vmem:[%s174 + $0x1e0] sm:$0xff]
        %v265 = vld [vmem:[%s174 + $0x1e8] sm:$0xff]
        %v266 = vld [vmem:[%s174 + $0x1f0] sm:$0xff]
        %v267 = vld [vmem:[%s174 + $0x1f8] sm:$0xff]
        %v268 = vstv %s203
        %v269 = vmul.f32 %v204, %v268
        %v270 = vmul.f32 %v205, %v268
        %v271 = vmul.f32 %v206, %v268
        %v272 = vmul.f32 %v207, %v268
        %v273 = vmul.f32 %v208, %v268
        %v274 = vmul.f32 %v209, %v268
        %v275 = vmul.f32 %v210, %v268
        %v276 = vmul.f32 %v211, %v268
        %v277 = vmul.f32 %v212, %v268
        %v278 = vmul.f32 %v213, %v268
        %v279 = vmul.f32 %v214, %v268
        %v280 = vmul.f32 %v215, %v268
        %v281 = vmul.f32 %v216, %v268
        %v282 = vmul.f32 %v217, %v268
        %v283 = vmul.f32 %v218, %v268
        %v284 = vmul.f32 %v219, %v268
        %v285 = vmul.f32 %v220, %v268
        %v286 = vmul.f32 %v221, %v268
        %v287 = vmul.f32 %v222, %v268
        %v288 = vmul.f32 %v223, %v268
        %v289 = vmul.f32 %v224, %v268
        %v290 = vmul.f32 %v225, %v268
        %v291 = vmul.f32 %v226, %v268
        %v292 = vmul.f32 %v227, %v268
        %v293 = vmul.f32 %v228, %v268
        %v294 = vmul.f32 %v229, %v268
        %v295 = vmul.f32 %v230, %v268
        %v296 = vmul.f32 %v231, %v268
        %v297 = vmul.f32 %v232, %v268
        %v298 = vmul.f32 %v233, %v268
        %v299 = vmul.f32 %v234, %v268
        %v300 = vmul.f32 %v235, %v268
        %v301 = vmul.f32 %v236, %v268
        %v302 = vmul.f32 %v237, %v268
        %v303 = vmul.f32 %v238, %v268
        %v304 = vmul.f32 %v239, %v268
        %v305 = vmul.f32 %v240, %v268
        %v306 = vmul.f32 %v241, %v268
        %v307 = vmul.f32 %v242, %v268
        %v308 = vmul.f32 %v243, %v268
        %v309 = vmul.f32 %v244, %v268
        %v310 = vmul.f32 %v245, %v268
        %v311 = vmul.f32 %v246, %v268
        %v312 = vmul.f32 %v247, %v268
        %v313 = vmul.f32 %v248, %v268
        %v314 = vmul.f32 %v249, %v268
        %v315 = vmul.f32 %v250, %v268
        %v316 = vmul.f32 %v251, %v268
        %v317 = vmul.f32 %v252, %v268
        %v318 = vmul.f32 %v253, %v268
        %v319 = vmul.f32 %v254, %v268
        %v320 = vmul.f32 %v255, %v268
        %v321 = vmul.f32 %v256, %v268
        %v322 = vmul.f32 %v257, %v268
        %v323 = vmul.f32 %v258, %v268
        %v324 = vmul.f32 %v259, %v268
        %v325 = vmul.f32 %v260, %v268
        %v326 = vmul.f32 %v261, %v268
        %v327 = vmul.f32 %v262, %v268
        %v328 = vmul.f32 %v263, %v268
        %v329 = vmul.f32 %v264, %v268
        %v330 = vmul.f32 %v265, %v268
        %v331 = vmul.f32 %v266, %v268
        %v332 = vmul.f32 %v267, %v268
        %v333 = vround.ne.pseudo %v269
        %v334 = vround.ne.pseudo %v270
        %v335 = vround.ne.pseudo %v271
        %v336 = vround.ne.pseudo %v272
        %v337 = vround.ne.pseudo %v273
        %v338 = vround.ne.pseudo %v274
        %v339 = vround.ne.pseudo %v275
        %v340 = vround.ne.pseudo %v276
        %v341 = vround.ne.pseudo %v277
        %v342 = vround.ne.pseudo %v278
        %v343 = vround.ne.pseudo %v279
        %v344 = vround.ne.pseudo %v280
        %v345 = vround.ne.pseudo %v281
        %v346 = vround.ne.pseudo %v282
        %v347 = vround.ne.pseudo %v283
        %v348 = vround.ne.pseudo %v284
        %v349 = vround.ne.pseudo %v285
        %v350 = vround.ne.pseudo %v286
        %v351 = vround.ne.pseudo %v287
        %v352 = vround.ne.pseudo %v288
        %v353 = vround.ne.pseudo %v289
        %v354 = vround.ne.pseudo %v290
        %v355 = vround.ne.pseudo %v291
        %v356 = vround.ne.pseudo %v292
        %v357 = vround.ne.pseudo %v293
        %v358 = vround.ne.pseudo %v294
        %v359 = vround.ne.pseudo %v295
        %v360 = vround.ne.pseudo %v296
        %v361 = vround.ne.pseudo %v297
        %v362 = vround.ne.pseudo %v298
        %v363 = vround.ne.pseudo %v299
        %v364 = vround.ne.pseudo %v300
        %v365 = vround.ne.pseudo %v301
        %v366 = vround.ne.pseudo %v302
        %v367 = vround.ne.pseudo %v303
        %v368 = vround.ne.pseudo %v304
        %v369 = vround.ne.pseudo %v305
        %v370 = vround.ne.pseudo %v306
        %v371 = vround.ne.pseudo %v307
        %v372 = vround.ne.pseudo %v308
        %v373 = vround.ne.pseudo %v309
        %v374 = vround.ne.pseudo %v310
        %v375 = vround.ne.pseudo %v311
        %v376 = vround.ne.pseudo %v312
        %v377 = vround.ne.pseudo %v313
        %v378 = vround.ne.pseudo %v314
        %v379 = vround.ne.pseudo %v315
        %v380 = vround.ne.pseudo %v316
        %v381 = vround.ne.pseudo %v317
        %v382 = vround.ne.pseudo %v318
        %v383 = vround.ne.pseudo %v319
        %v384 = vround.ne.pseudo %v320
        %v385 = vround.ne.pseudo %v321
        %v386 = vround.ne.pseudo %v322
        %v387 = vround.ne.pseudo %v323
        %v388 = vround.ne.pseudo %v324
        %v389 = vround.ne.pseudo %v325
        %v390 = vround.ne.pseudo %v326
        %v391 = vround.ne.pseudo %v327
        %v392 = vround.ne.pseudo %v328
        %v393 = vround.ne.pseudo %v329
        %v394 = vround.ne.pseudo %v330
        %v395 = vround.ne.pseudo %v331
        %v396 = vround.ne.pseudo %v332
        %v397 = vrcp.pop %v268
        %v398 = vmul.f32 %v333, %v397
        %v399 = vmul.f32 %v334, %v397
        %v400 = vmul.f32 %v335, %v397
        %v401 = vmul.f32 %v336, %v397
        %v402 = vmul.f32 %v337, %v397
        %v403 = vmul.f32 %v338, %v397
        %v404 = vmul.f32 %v339, %v397
        %v405 = vmul.f32 %v340, %v397
        %v406 = vmul.f32 %v341, %v397
        %v407 = vmul.f32 %v342, %v397
        %v408 = vmul.f32 %v343, %v397
        %v409 = vmul.f32 %v344, %v397
        %v410 = vmul.f32 %v345, %v397
        %v411 = vmul.f32 %v346, %v397
        %v412 = vmul.f32 %v347, %v397
        %v413 = vmul.f32 %v348, %v397
        %v414 = vmul.f32 %v349, %v397
        %v415 = vmul.f32 %v350, %v397
        %v416 = vmul.f32 %v351, %v397
        %v417 = vmul.f32 %v352, %v397
        %v418 = vmul.f32 %v353, %v397
        %v419 = vmul.f32 %v354, %v397
        %v420 = vmul.f32 %v355, %v397
        %v421 = vmul.f32 %v356, %v397
        %v422 = vmul.f32 %v357, %v397
        %v423 = vmul.f32 %v358, %v397
        %v424 = vmul.f32 %v359, %v397
        %v425 = vmul.f32 %v360, %v397
        %v426 = vmul.f32 %v361, %v397
        %v427 = vmul.f32 %v362, %v397
        %v428 = vmul.f32 %v363, %v397
        %v429 = vmul.f32 %v364, %v397
        %v430 = vmul.f32 %v365, %v397
        %v431 = vmul.f32 %v366, %v397
        %v432 = vmul.f32 %v367, %v397
        %v433 = vmul.f32 %v368, %v397
        %v434 = vmul.f32 %v369, %v397
        %v435 = vmul.f32 %v370, %v397
        %v436 = vmul.f32 %v371, %v397
        %v437 = vmul.f32 %v372, %v397
        %v438 = vmul.f32 %v373, %v397
        %v439 = vmul.f32 %v374, %v397
        %v440 = vmul.f32 %v375, %v397
        %v441 = vmul.f32 %v376, %v397
        %v442 = vmul.f32 %v377, %v397
        %v443 = vmul.f32 %v378, %v397
        %v444 = vmul.f32 %v379, %v397
        %v445 = vmul.f32 %v380, %v397
        %v446 = vmul.f32 %v381, %v397
        %v447 = vmul.f32 %v382, %v397
        %v448 = vmul.f32 %v383, %v397
        %v449 = vmul.f32 %v384, %v397
        %v450 = vmul.f32 %v385, %v397
        %v451 = vmul.f32 %v386, %v397
        %v452 = vmul.f32 %v387, %v397
        %v453 = vmul.f32 %v388, %v397
        %v454 = vmul.f32 %v389, %v397
        %v455 = vmul.f32 %v390, %v397
        %v456 = vmul.f32 %v391, %v397
        %v457 = vmul.f32 %v392, %v397
        %v458 = vmul.f32 %v393, %v397
        %v459 = vmul.f32 %v394, %v397
        %v460 = vmul.f32 %v395, %v397
        %v461 = vmul.f32 %v396, %v397
        %462 = vst [vmem:[%s194] sm:$0xff] %v398
        %463 = vst [vmem:[%s194 + $0x8] sm:$0xff] %v399
        %464 = vst [vmem:[%s194 + $0x10] sm:$0xff] %v400
        %465 = vst [vmem:[%s194 + $0x18] sm:$0xff] %v401
        %466 = vst [vmem:[%s194 + $0x20] sm:$0xff] %v402
        %467 = vst [vmem:[%s194 + $0x28] sm:$0xff] %v403
        %468 = vst [vmem:[%s194 + $0x30] sm:$0xff] %v404
        %469 = vst [vmem:[%s194 + $0x38] sm:$0xff] %v405
        %470 = vst [vmem:[%s194 + $0x40] sm:$0xff] %v406
        %471 = vst [vmem:[%s194 + $0x48] sm:$0xff] %v407
        %472 = vst [vmem:[%s194 + $0x50] sm:$0xff] %v408
        %473 = vst [vmem:[%s194 + $0x58] sm:$0xff] %v409
        %474 = vst [vmem:[%s194 + $0x60] sm:$0xff] %v410
        %475 = vst [vmem:[%s194 + $0x68] sm:$0xff] %v411
        %476 = vst [vmem:[%s194 + $0x70] sm:$0xff] %v412
        %477 = vst [vmem:[%s194 + $0x78] sm:$0xff] %v413
        %478 = vst [vmem:[%s194 + $0x80] sm:$0xff] %v414
        %479 = vst [vmem:[%s194 + $0x88] sm:$0xff] %v415
        %480 = vst [vmem:[%s194 + $0x90] sm:$0xff] %v416
        %481 = vst [vmem:[%s194 + $0x98] sm:$0xff] %v417
        %482 = vst [vmem:[%s194 + $0xa0] sm:$0xff] %v418
        %483 = vst [vmem:[%s194 + $0xa8] sm:$0xff] %v419
        %484 = vst [vmem:[%s194 + $0xb0] sm:$0xff] %v420
        %485 = vst [vmem:[%s194 + $0xb8] sm:$0xff] %v421
        %486 = vst [vmem:[%s194 + $0xc0] sm:$0xff] %v422
        %487 = vst [vmem:[%s194 + $0xc8] sm:$0xff] %v423
        %488 = vst [vmem:[%s194 + $0xd0] sm:$0xff] %v424
        %489 = vst [vmem:[%s194 + $0xd8] sm:$0xff] %v425
        %490 = vst [vmem:[%s194 + $0xe0] sm:$0xff] %v426
        %491 = vst [vmem:[%s194 + $0xe8] sm:$0xff] %v427
        %492 = vst [vmem:[%s194 + $0xf0] sm:$0xff] %v428
        %493 = vst [vmem:[%s194 + $0xf8] sm:$0xff] %v429
        %494 = vst [vmem:[%s194 + $0x100] sm:$0xff] %v430
        %495 = vst [vmem:[%s194 + $0x108] sm:$0xff] %v431
        %496 = vst [vmem:[%s194 + $0x110] sm:$0xff] %v432
        %497 = vst [vmem:[%s194 + $0x118] sm:$0xff] %v433
        %498 = vst [vmem:[%s194 + $0x120] sm:$0xff] %v434
        %499 = vst [vmem:[%s194 + $0x128] sm:$0xff] %v435
        %500 = vst [vmem:[%s194 + $0x130] sm:$0xff] %v436
        %501 = vst [vmem:[%s194 + $0x138] sm:$0xff] %v437
        %502 = vst [vmem:[%s194 + $0x140] sm:$0xff] %v438
        %503 = vst [vmem:[%s194 + $0x148] sm:$0xff] %v439
        %504 = vst [vmem:[%s194 + $0x150] sm:$0xff] %v440
        %505 = vst [vmem:[%s194 + $0x158] sm:$0xff] %v441
        %506 = vst [vmem:[%s194 + $0x160] sm:$0xff] %v442
        %507 = vst [vmem:[%s194 + $0x168] sm:$0xff] %v443
        %508 = vst [vmem:[%s194 + $0x170] sm:$0xff] %v444
        %509 = vst [vmem:[%s194 + $0x178] sm:$0xff] %v445
        %510 = vst [vmem:[%s194 + $0x180] sm:$0xff] %v446
        %511 = vst [vmem:[%s194 + $0x188] sm:$0xff] %v447
        %512 = vst [vmem:[%s194 + $0x190] sm:$0xff] %v448
        %513 = vst [vmem:[%s194 + $0x198] sm:$0xff] %v449
        %514 = vst [vmem:[%s194 + $0x1a0] sm:$0xff] %v450
        %515 = vst [vmem:[%s194 + $0x1a8] sm:$0xff] %v451
        %516 = vst [vmem:[%s194 + $0x1b0] sm:$0xff] %v452
        %517 = vst [vmem:[%s194 + $0x1b8] sm:$0xff] %v453
        %518 = vst [vmem:[%s194 + $0x1c0] sm:$0xff] %v454
        %519 = vst [vmem:[%s194 + $0x1c8] sm:$0xff] %v455
        %520 = vst [vmem:[%s194 + $0x1d0] sm:$0xff] %v456
        %521 = vst [vmem:[%s194 + $0x1d8] sm:$0xff] %v457
        %522 = vst [vmem:[%s194 + $0x1e0] sm:$0xff] %v458
        %523 = vst [vmem:[%s194 + $0x1e8] sm:$0xff] %v459
        %524 = vst [vmem:[%s194 + $0x1f0] sm:$0xff] %v460
        %525 = vst [vmem:[%s194 + $0x1f8] sm:$0xff] %v461
        %s526 = smul.u32 %s25, 128
        %v527 = vlaneseq
        %v528 = vshrl.u32 %v527, 7
        %v529 = vadd.s32 %v528, 8
        %v530 = vadd.s32 %v528, 16
        %v531 = vadd.s32 %v528, 24
        %v532 = vadd.s32 %v528, 32
        %v533 = vadd.s32 %v528, 40
        %v534 = vadd.s32 %v528, 48
        %v535 = vadd.s32 %v528, 56
        %v536 = vadd.s32 %v528, 64
        %v537 = vadd.s32 %v528, 72
        %v538 = vadd.s32 %v528, 80
        %v539 = vadd.s32 %v528, 88
        %v540 = vadd.s32 %v528, 96
        %v541 = vadd.s32 %v528, 104
        %v542 = vadd.s32 %v528, 112
        %v543 = vadd.s32 %v528, 120
        %v544 = vstv %s526
        %v545 = vadd.s32 %v544, %v528
        %v546 = vadd.s32 %v544, %v529
        %v547 = vadd.s32 %v544, %v530
        %v548 = vadd.s32 %v544, %v531
        %v549 = vadd.s32 %v544, %v532
        %v550 = vadd.s32 %v544, %v533
        %v551 = vadd.s32 %v544, %v534
        %v552 = vadd.s32 %v544, %v535
        %v553 = vadd.s32 %v544, %v536
        %v554 = vadd.s32 %v544, %v537
        %v555 = vadd.s32 %v544, %v538
        %v556 = vadd.s32 %v544, %v539
        %v557 = vadd.s32 %v544, %v540
        %v558 = vadd.s32 %v544, %v541
        %v559 = vadd.s32 %v544, %v542
        %v560 = vadd.s32 %v544, %v543
        %vm561 = vcmp.lt.s32.totalorder %v545, 256
        %vm562 = vcmp.lt.s32.totalorder %v546, 256
        %vm563 = vcmp.lt.s32.totalorder %v547, 256
        %vm564 = vcmp.lt.s32.totalorder %v548, 256
        %vm565 = vcmp.lt.s32.totalorder %v549, 256
        %vm566 = vcmp.lt.s32.totalorder %v550, 256
        %vm567 = vcmp.lt.s32.totalorder %v551, 256
        %vm568 = vcmp.lt.s32.totalorder %v552, 256
        %vm569 = vcmp.lt.s32.totalorder %v553, 256
        %vm570 = vcmp.lt.s32.totalorder %v554, 256
        %vm571 = vcmp.lt.s32.totalorder %v555, 256
        %vm572 = vcmp.lt.s32.totalorder %v556, 256
        %vm573 = vcmp.lt.s32.totalorder %v557, 256
        %vm574 = vcmp.lt.s32.totalorder %v558, 256
        %vm575 = vcmp.lt.s32.totalorder %v559, 256
        %vm576 = vcmp.lt.s32.totalorder %v560, 256
        %v577 = vand.u32 2147483647, %v333
        %v578 = vand.u32 2147483647, %v334
        %v579 = vand.u32 2147483647, %v335
        %v580 = vand.u32 2147483647, %v336
        %v581 = vand.u32 2147483647, %v337
        %v582 = vand.u32 2147483647, %v338
        %v583 = vand.u32 2147483647, %v339
        %v584 = vand.u32 2147483647, %v340
        %v585 = vand.u32 2147483647, %v341
        %v586 = vand.u32 2147483647, %v342
        %v587 = vand.u32 2147483647, %v343
        %v588 = vand.u32 2147483647, %v344
        %v589 = vand.u32 2147483647, %v345
        %v590 = vand.u32 2147483647, %v346
        %v591 = vand.u32 2147483647, %v347
        %v592 = vand.u32 2147483647, %v348
        %v593 = vand.u32 2147483647, %v349
        %v594 = vand.u32 2147483647, %v350
        %v595 = vand.u32 2147483647, %v351
        %v596 = vand.u32 2147483647, %v352
        %v597 = vand.u32 2147483647, %v353
        %v598 = vand.u32 2147483647, %v354
        %v599 = vand.u32 2147483647, %v355
        %v600 = vand.u32 2147483647, %v356
        %v601 = vand.u32 2147483647, %v357
        %v602 = vand.u32 2147483647, %v358
        %v603 = vand.u32 2147483647, %v359
        %v604 = vand.u32 2147483647, %v360
        %v605 = vand.u32 2147483647, %v361
        %v606 = vand.u32 2147483647, %v362
        %v607 = vand.u32 2147483647, %v363
        %v608 = vand.u32 2147483647, %v364
        %v609 = vand.u32 2147483647, %v365
        %v610 = vand.u32 2147483647, %v366
        %v611 = vand.u32 2147483647, %v367
        %v612 = vand.u32 2147483647, %v368
        %v613 = vand.u32 2147483647, %v369
        %v614 = vand.u32 2147483647, %v370
        %v615 = vand.u32 2147483647, %v371
        %v616 = vand.u32 2147483647, %v372
        %v617 = vand.u32 2147483647, %v373
        %v618 = vand.u32 2147483647, %v374
        %v619 = vand.u32 2147483647, %v375
        %v620 = vand.u32 2147483647, %v376
        %v621 = vand.u32 2147483647, %v377
        %v622 = vand.u32 2147483647, %v378
        %v623 = vand.u32 2147483647, %v379
        %v624 = vand.u32 2147483647, %v380
        %v625 = vand.u32 2147483647, %v381
        %v626 = vand.u32 2147483647, %v382
        %v627 = vand.u32 2147483647, %v383
        %v628 = vand.u32 2147483647, %v384
        %v629 = vand.u32 2147483647, %v385
        %v630 = vand.u32 2147483647, %v386
        %v631 = vand.u32 2147483647, %v387
        %v632 = vand.u32 2147483647, %v388
        %v633 = vand.u32 2147483647, %v389
        %v634 = vand.u32 2147483647, %v390
        %v635 = vand.u32 2147483647, %v391
        %v636 = vand.u32 2147483647, %v392
        %v637 = vand.u32 2147483647, %v393
        %v638 = vand.u32 2147483647, %v394
        %v639 = vand.u32 2147483647, %v395
        %v640 = vand.u32 2147483647, %v396
        %v641 = vsel %vm561, %v577, 0.0
        %v642 = vsel %vm561, %v578, 0.0
        %v643 = vsel %vm561, %v579, 0.0
        %v644 = vsel %vm561, %v580, 0.0
        %v645 = vsel %vm562, %v581, 0.0
        %v646 = vsel %vm562, %v582, 0.0
        %v647 = vsel %vm562, %v583, 0.0
        %v648 = vsel %vm562, %v584, 0.0
        %v649 = vsel %vm563, %v585, 0.0
        %v650 = vsel %vm563, %v586, 0.0
        %v651 = vsel %vm563, %v587, 0.0
        %v652 = vsel %vm563, %v588, 0.0
        %v653 = vsel %vm564, %v589, 0.0
        %v654 = vsel %vm564, %v590, 0.0
        %v655 = vsel %vm564, %v591, 0.0
        %v656 = vsel %vm564, %v592, 0.0
        %v657 = vsel %vm565, %v593, 0.0
        %v658 = vsel %vm565, %v594, 0.0
        %v659 = vsel %vm565, %v595, 0.0
        %v660 = vsel %vm565, %v596, 0.0
        %v661 = vsel %vm566, %v597, 0.0
        %v662 = vsel %vm566, %v598, 0.0
        %v663 = vsel %vm566, %v599, 0.0
        %v664 = vsel %vm566, %v600, 0.0
        %v665 = vsel %vm567, %v601, 0.0
        %v666 = vsel %vm567, %v602, 0.0
        %v667 = vsel %vm567, %v603, 0.0
        %v668 = vsel %vm567, %v604, 0.0
        %v669 = vsel %vm568, %v605, 0.0
        %v670 = vsel %vm568, %v606, 0.0
        %v671 = vsel %vm568, %v607, 0.0
        %v672 = vsel %vm568, %v608, 0.0
        %v673 = vsel %vm569, %v609, 0.0
        %v674 = vsel %vm569, %v610, 0.0
        %v675 = vsel %vm569, %v611, 0.0
        %v676 = vsel %vm569, %v612, 0.0
        %v677 = vsel %vm570, %v613, 0.0
        %v678 = vsel %vm570, %v614, 0.0
        %v679 = vsel %vm570, %v615, 0.0
        %v680 = vsel %vm570, %v616, 0.0
        %v681 = vsel %vm571, %v617, 0.0
        %v682 = vsel %vm571, %v618, 0.0
        %v683 = vsel %vm571, %v619, 0.0
        %v684 = vsel %vm571, %v620, 0.0
        %v685 = vsel %vm572, %v621, 0.0
        %v686 = vsel %vm572, %v622, 0.0
        %v687 = vsel %vm572, %v623, 0.0
        %v688 = vsel %vm572, %v624, 0.0
        %v689 = vsel %vm573, %v625, 0.0
        %v690 = vsel %vm573, %v626, 0.0
        %v691 = vsel %vm573, %v627, 0.0
        %v692 = vsel %vm573, %v628, 0.0
        %v693 = vsel %vm574, %v629, 0.0
        %v694 = vsel %vm574, %v630, 0.0
        %v695 = vsel %vm574, %v631, 0.0
        %v696 = vsel %vm574, %v632, 0.0
        %v697 = vsel %vm575, %v633, 0.0
        %v698 = vsel %vm575, %v634, 0.0
        %v699 = vsel %vm575, %v635, 0.0
        %v700 = vsel %vm575, %v636, 0.0
        %v701 = vsel %vm576, %v637, 0.0
        %v702 = vsel %vm576, %v638, 0.0
        %v703 = vsel %vm576, %v639, 0.0
        %v704 = vsel %vm576, %v640, 0.0
        %v705 = vmax.f32 %v641, %v645
        %v706 = vmax.f32 %v705, %v649
        %v707 = vmax.f32 %v706, %v653
        %v708 = vmax.f32 %v707, %v657
        %v709 = vmax.f32 %v708, %v661
        %v710 = vmax.f32 %v709, %v665
        %v711 = vmax.f32 %v710, %v669
        %v712 = vmax.f32 %v711, %v673
        %v713 = vmax.f32 %v712, %v677
        %v714 = vmax.f32 %v713, %v681
        %v715 = vmax.f32 %v714, %v685
        %v716 = vmax.f32 %v715, %v689
        %v717 = vmax.f32 %v716, %v693
        %v718 = vmax.f32 %v717, %v697
        %v719 = vmax.f32 %v718, %v701
        %v720 = vrot.slane %v719, 4
        %v721 = vmax.f32 %v719, %v720
        %v722 = vrot.slane %v721, 2
        %v723 = vmax.f32 %v721, %v722
        %v724 = vrot.slane %v723, 1
        %v725 = vmax.f32 %v723, %v724
        %v726 = vmax.f32 %v642, %v646
        %v727 = vmax.f32 %v726, %v650
        %v728 = vmax.f32 %v727, %v654
        %v729 = vmax.f32 %v728, %v658
        %v730 = vmax.f32 %v729, %v662
        %v731 = vmax.f32 %v730, %v666
        %v732 = vmax.f32 %v731, %v670
        %v733 = vmax.f32 %v732, %v674
        %v734 = vmax.f32 %v733, %v678
        %v735 = vmax.f32 %v734, %v682
        %v736 = vmax.f32 %v735, %v686
        %v737 = vmax.f32 %v736, %v690
        %v738 = vmax.f32 %v737, %v694
        %v739 = vmax.f32 %v738, %v698
        %v740 = vmax.f32 %v739, %v702
        %v741 = vrot.slane %v740, 4
        %v742 = vmax.f32 %v740, %v741
        %v743 = vrot.slane %v742, 2
        %v744 = vmax.f32 %v742, %v743
        %v745 = vrot.slane %v744, 1
        %v746 = vmax.f32 %v744, %v745
        %v747 = vmax.f32 %v643, %v647
        %v748 = vmax.f32 %v747, %v651
        %v749 = vmax.f32 %v748, %v655
        %v750 = vmax.f32 %v749, %v659
        %v751 = vmax.f32 %v750, %v663
        %v752 = vmax.f32 %v751, %v667
        %v753 = vmax.f32 %v752, %v671
        %v754 = vmax.f32 %v753, %v675
        %v755 = vmax.f32 %v754, %v679
        %v756 = vmax.f32 %v755, %v683
        %v757 = vmax.f32 %v756, %v687
        %v758 = vmax.f32 %v757, %v691
        %v759 = vmax.f32 %v758, %v695
        %v760 = vmax.f32 %v759, %v699
        %v761 = vmax.f32 %v760, %v703
        %v762 = vrot.slane %v761, 4
        %v763 = vmax.f32 %v761, %v762
        %v764 = vrot.slane %v763, 2
        %v765 = vmax.f32 %v763, %v764
        %v766 = vrot.slane %v765, 1
        %v767 = vmax.f32 %v765, %v766
        %v768 = vmax.f32 %v644, %v648
        %v769 = vmax.f32 %v768, %v652
        %v770 = vmax.f32 %v769, %v656
        %v771 = vmax.f32 %v770, %v660
        %v772 = vmax.f32 %v771, %v664
        %v773 = vmax.f32 %v772, %v668
        %v774 = vmax.f32 %v773, %v672
        %v775 = vmax.f32 %v774, %v676
        %v776 = vmax.f32 %v775, %v680
        %v777 = vmax.f32 %v776, %v684
        %v778 = vmax.f32 %v777, %v688
        %v779 = vmax.f32 %v778, %v692
        %v780 = vmax.f32 %v779, %v696
        %v781 = vmax.f32 %v780, %v700
        %v782 = vmax.f32 %v781, %v704
        %v783 = vrot.slane %v782, 4
        %v784 = vmax.f32 %v782, %v783
        %v785 = vrot.slane %v784, 2
        %v786 = vmax.f32 %v784, %v785
        %v787 = vrot.slane %v786, 1
        %v788 = vmax.f32 %v786, %v787
        %v789 = vmax.f32 %v725, %v746
        %v790 = vmax.f32 %v767, %v788
        %v791 = vmax.f32 %v789, %v790
        %792 = vmax.xlane.f32.xlu0 %v791
        %v793 = vpop.xlane.xlu0 %792
        %794 = vst [vmem:[%s200] sm:$0x1] %v793
        %s795 = sand.u32 %s80, 1
        %s796 = scalar_lea.sflag [#allocation5], %s795
        %s797 = sand.u32 %s80, 1
        %s798 = smul.addr %s797, 512
        %s799 = scalar_lea.vmem [#allocation6], %s798
        %s800 = sand.u32 %s106, 1
        %s801 = scalar_lea.sflag [#allocation8], %s800
        %s802 = sand.u32 %s106, 1
        %s803 = scalar_lea.vmem [#allocation7], %s802
        // Predicated region
        $region33: #{tpu_custom_call.1} parent=27 // pred_check
          %p804 = pneg %p90
        $region34: #{tpu_custom_call.1} parent=27 // pred_check_branch
          %806 = sbr.rel (%p804) target = $region36
        $region35: #{tpu_custom_call.1} parent=27 // pred_region
          %s807 = smul.u32 16, %s25
          %s809 = ssub.s32 8192, 8192
          %810 = vsyncadd %s796, %s809
          %s811 = smul.addr %s807, 4
          %s812 = smul.addr %s811, 128
          %s813 = scalar_lea.hbm %s2, %s812
          %s814 = sshll.u32 %s799, 4
          %s815 = int_to_ptr.vmem [resolvable:$true] %s814
          %820 = dma.vmem_to_hbm [thread:$0]  %s815, 8192, %s813, %s796, 512, 512, 32
        $region36: #{tpu_custom_call.1} parent=27 // pred_fallthru
          _
        // Predicated region
        $region37: #{tpu_custom_call.1} parent=27 // pred_check
          %p821 = pneg %p116
        $region38: #{tpu_custom_call.1} parent=27 // pred_check_branch
          %823 = sbr.rel (%p821) target = $region40
        $region39: #{tpu_custom_call.1} parent=27 // pred_region
          %s825 = ssub.s32 16, 16
          %826 = vsyncadd %s801, %s825
          %s827 = smul.addr %s25, 16
          %s828 = scalar_lea.hbm %s3, %s827
          %s830 = sshll.u32 %s803, 4
          %s831 = int_to_ptr.vmem [resolvable:$true] %s830
          %833 = dma.vmem_to_hbm [thread:$0]  %s831, 16, %s828, %s801
        $region40: #{tpu_custom_call.1} parent=27 // pred_fallthru
          _
      $region28: #{tpu_custom_call.1} parent=5 // pred_fallthru
        _
      %p834 = scmp.le.s32.totalorder 2, %s20
      // Predicated region
      $region41: #{tpu_custom_call.1} parent=5 // pred_check
        %p835 = pneg %p834
      $region42: #{tpu_custom_call.1} parent=5 // pred_check_branch
        %837 = sbr.rel (%p835) target = $region44
      $region43: #{tpu_custom_call.1} parent=5 // pred_region
        %s838 = ssub.s32 %s20, 2
        // Predicated region
        $region45: #{tpu_custom_call.1} parent=43 // pred_check
          %p839 = pneg %p96
        $region46: #{tpu_custom_call.1} parent=43 // pred_check_branch
          %841 = sbr.rel (%p839) target = $region48
        $region47: #{tpu_custom_call.1} parent=43 // pred_region
          %s842 = sand.u32 %s81, 1
          %s843 = scalar_lea.sflag [#allocation5], %s842
          %s844 = sand.u32 %s81, 1
          %s845 = smul.addr %s844, 512
          %s846 = scalar_lea.vmem [#allocation6], %s845
          %847 = dma.done %s843, 8192
        $region48: #{tpu_custom_call.1} parent=43 // pred_fallthru
          _
        // Predicated region
        $region49: #{tpu_custom_call.1} parent=43 // pred_check
          %p848 = pneg %p122
        $region50: #{tpu_custom_call.1} parent=43 // pred_check_branch
          %850 = sbr.rel (%p848) target = $region52
        $region51: #{tpu_custom_call.1} parent=43 // pred_region
          %s851 = sand.u32 %s107, 1
          %s852 = scalar_lea.sflag [#allocation8], %s851
          %s853 = sand.u32 %s107, 1
          %s854 = scalar_lea.vmem [#allocation7], %s853
          %855 = dma.done %s852, 16
        $region52: #{tpu_custom_call.1} parent=43 // pred_fallthru
          _
      $region44: #{tpu_custom_call.1} parent=5 // pred_fallthru
        _
    $region6: #{tpu_custom_call.1} parent=1 // loop_footer
      %s24 = sadd.s32 1, %s20
    $region7: #{tpu_custom_call.1} parent=1 // loop_footer_branch
      %19 = sbr.rel target = $region3
    $region8: #{tpu_custom_call.1} parent=1 // loop_exit
      _
    %856 = vsyncpa [#allocation4], 1
    %s857 = scalar_lea.sflag [#allocation4], 1
    %858 = vsyncpa %s857, 1
    %859 = vsyncpa [#allocation5], 1
    %s860 = scalar_lea.sflag [#allocation5], 1
    %861 = vsyncpa %s860, 1
    %862 = vsyncpa [#allocation8], 1
    %s863 = scalar_lea.sflag [#allocation8], 1
    %864 = vsyncpa %s863, 1

</llo_original>
